<compile_context>
chip_gen: v5e
topology: v5e:2x2
jax: 0.10.0
libtpu: 0.0.40
codegen_flags: <defaults>
</compile_context>

<pallas_src>
import math

import jax
import jax.numpy as jnp
from jax.experimental import pallas as pl
from jax.experimental.pallas import tpu as pltpu


def _round_up(x, m):
    return ((x + m - 1) // m) * m


def _pad_or_crop(arr, axis, lo, hi):
    """Pad (positive) or crop (negative) one axis by lo/hi elements."""
    pads = [(0, 0)] * arr.ndim
    pads[axis] = (max(lo, 0), max(hi, 0))
    arr = jnp.pad(arr, pads)
    start = max(-lo, 0)
    stop = arr.shape[axis] - max(-hi, 0)
    return jax.lax.slice_in_dim(arr, start, stop, axis=axis)


def _deconv_mxu_kernel(w_ref, b_ref, x_ref, o_ref):
    """One (batch n, output tile l) step: a single fused bf16 MXU matmul.

    w_ref: (Cout, Kt)     VMEM bf16  -- all KH*KW taps stacked along contraction
    b_ref: (Cout, 1)      VMEM f32   -- bias
    x_ref: (1, Kt, LT)    VMEM bf16  -- im2col'd input tile (lane-dense)
    o_ref: (1, Cout, LT)  VMEM       -- output tile (lane-dense, multiple of 128)
    """
    acc = jnp.dot(w_ref[...], x_ref[0], preferred_element_type=jnp.float32)
    o_ref[0] = (acc + b_ref[...]).astype(o_ref.dtype)


def conv_transpose2d_pallas(x, weight, bias, stride, padding, output_padding,
                            dilation, groups=1):
    """Matches torch.nn.functional.conv_transpose2d (groups=1).

    x:      (N, Cin, H, W)             NCHW
    weight: (Cin, Cout, KH, KW)        PyTorch ConvTranspose2d convention
    bias:   (Cout,) or None
    """
    assert groups == 1  # TODO(synk): grouped transposed conv not implemented
    sH, sW = stride
    pH, pW = padding
    opH, opW = output_padding
    dH, dW = dilation
    N, Cin, H, W = x.shape
    Cin_w, Cout, KH, KW = weight.shape
    assert Cin_w == Cin

    OH = (H - 1) * sH - 2 * pH + dH * (KH - 1) + opH + 1
    OW = (W - 1) * sW - 2 * pW + dW * (KW - 1) + opW + 1

    # conv_transpose == direct conv of the zero-dilated, padded input with the
    # spatially flipped kernel.
    # TODO(synk): stride-phase decomposition would kill the structural zeros here.
    Hd, Wd = (H - 1) * sH + 1, (W - 1) * sW + 1
    xd = jnp.zeros((N, Cin, Hd, Wd), x.dtype).at[:, :, ::sH, ::sW].set(x)
    pt, pb = dH * (KH - 1) - pH, dH * (KH - 1) - pH + opH
    plft, prgt = dW * (KW - 1) - pW, dW * (KW - 1) - pW + opW
    x_pad = _pad_or_crop(xd, 2, pt, pb)
    x_pad = _pad_or_crop(x_pad, 3, plft, prgt)
    Hp, Wp = x_pad.shape[2], x_pad.shape[3]
    assert Hp == OH + dH * (KH - 1) and Wp == OW + dW * (KW - 1)

    # --- im2col over the KH*KW taps (one wrapper pass, XLA-fused).  The kernel
    #     then runs ONE (Cout, K) @ (K, LT) matmul per tile instead of KH*KW
    #     tiny K=Cin matmuls with unaligned lane slices.  Columns are already
    #     cropped to the true OH*OW output grid (no post-kernel reshuffle).
    cols = []
    for kh in range(KH):
        for kw in range(KW):
            cols.append(jax.lax.slice(
                x_pad, (0, 0, kh * dH, kw * dW),
                (N, Cin, kh * dH + OH, kw * dW + OW)))
    x_col = jnp.stack(cols, axis=1).reshape(N, KH * KW * Cin, OH * OW)

    # Flipped kernel, laid out to match x_col's contraction axis:
    #   w_mat[co, (kh*KW + kw)*Cin + ci] = weight[ci, co, KH-1-kh, KW-1-kw]
    wf = jnp.flip(weight, axis=(2, 3))                       # (Cin, Cout, KH, KW)
    w_mat = jnp.transpose(wf, (1, 2, 3, 0)).reshape(Cout, KH * KW * Cin)

    # --- bf16 operands (native MXU rate); f32 accumulation happens in-kernel.
    cdt = jnp.bfloat16
    Kt = KH * KW * Cin
    Ktp = _round_up(Kt, 16)                                  # bf16 sublane packing
    in_itemsize = jnp.dtype(cdt).itemsize
    out_itemsize = jnp.dtype(x.dtype).itemsize

    L = OH * OW
    LT = min(2048, _round_up(L, 128))                        # lane-dense tile
    # keep the per-step footprint modest (in/out blocks are double-buffered)
    vmem_budget = 24 * 1024 * 1024
    while LT > 256 and 2 * LT * (Ktp * in_itemsize + Cout * out_itemsize) > vmem_budget:
        LT //= 2
    # keep >= 2 parallel grid steps for dual-TensorCore chips when batch == 1
    if N == 1 and pl.cdiv(L, LT) < 2 and L > 128:
        LT = max(128, _round_up(pl.cdiv(L, 2), 128))
    NL = pl.cdiv(L, LT)
    Lp = NL * LT

    x_col_p = jnp.zeros((N, Ktp, Lp), cdt)
    x_col_p = x_col_p.at[:, :Kt, :L].set(x_col.astype(cdt))
    w_p = jnp.zeros((Cout, Ktp), cdt).at[:, :Kt].set(w_mat.astype(cdt))
    if bias is None:
        bias = jnp.zeros((Cout,), jnp.float32)
    b_col = bias.astype(jnp.float32).reshape(Cout, 1)

    # VMEM limit from actual buffer sizes (not a blanket 48 MiB request).
    vmem_needed = (2 * LT * (Ktp * in_itemsize + Cout * out_itemsize)
                   + 2 * (Cout * Ktp * in_itemsize + Cout * 4) + (1 << 20))
    vmem_limit = int(min(64 * 1024 * 1024, max(vmem_needed, 4 * 1024 * 1024)))

    out_flat = pl.pallas_call(
        _deconv_mxu_kernel,
        out_shape=jax.ShapeDtypeStruct((N, Cout, Lp), x.dtype),
        grid=(N, NL),
        in_specs=[
            pl.BlockSpec((Cout, Ktp), lambda n, l: (0, 0)),      # fused weights
            pl.BlockSpec((Cout, 1), lambda n, l: (0, 0)),        # bias
            pl.BlockSpec((1, Ktp, LT), lambda n, l: (n, 0, l)),  # im2col tile
        ],
        out_specs=pl.BlockSpec((1, Cout, LT), lambda n, l: (n, 0, l)),
        compiler_params=pltpu.CompilerParams(
            dimension_semantics=("parallel", "parallel"),
            vmem_limit_bytes=vmem_limit,
        ),
    )(w_p, b_col, x_col_p)

    # Lp == L in the common case, so the slice is a no-op and reshape is free.
    out = out_flat[:, :, :L].reshape(N, Cout, OH, OW)
    return out


def gaussian_kl(mu_q, rho_q, mu_p, rho_p):
    """Gaussian.compute_kl: 0.5*sum(log(s_p^2/s_q^2)+(mu_q-mu_p)^2/s_p^2+s_q^2/s_p^2-1)."""
    sq2 = jax.nn.softplus(rho_q) ** 2
    sp2 = jax.nn.softplus(rho_p) ** 2
    return (0.5 * (jnp.log(sp2 / sq2) + (mu_q - mu_p) ** 2 / sp2 + sq2 / sp2 - 1.0)).sum()


if __name__ == "__main__":
    # Small shapes consistent with the module (a 2x-upsampling deconv layer).
    N, Cin, H, W = 2, 4, 16, 16
    Cout, KH, KW = 8, 3, 3
    stride, padding, output_padding, dilation = (2, 2), (1, 1), (1, 1), (1, 1)
    rho_prior = math.log(math.expm1(0.03))          # softplus(rho_prior) = 0.03

    key = jax.random.PRNGKey(0)
    k_wmu, k_bmu, k_dw, k_db, k_weps, k_beps, k_x = jax.random.split(key, 7)

    bound = 1.0 / math.sqrt(Cin * KH * KW)
    w_mu0 = jax.random.uniform(k_wmu, (Cin, Cout, KH, KW), jnp.float32, -bound, bound)
    b_mu0 = jax.random.uniform(k_bmu, (Cout,), jnp.float32, -bound, bound)

    # prior = init params (fixed); posterior = init + small drift (non-zero KL)
    w_mu_q = w_mu0 + 0.01 * jax.random.normal(k_dw, w_mu0.shape, jnp.float32)
    b_mu_q = b_mu0 + 0.01 * jax.random.normal(k_db, b_mu0.shape, jnp.float32)
    w_rho_q = jnp.full(w_mu0.shape, rho_prior, jnp.float32)   # posterior rho
    b_rho_q = jnp.full(b_mu0.shape, rho_prior, jnp.float32)
    w_rho_p = jnp.full(w_mu0.shape, rho_prior, jnp.float32)   # distinct prior rho tensors
    b_rho_p = jnp.full(b_mu0.shape, rho_prior, jnp.float32)

    # layer.sample(): current = mu + softplus(rho) * eps
    w_eps = jax.random.normal(k_weps, w_mu0.shape, jnp.float32)
    b_eps = jax.random.normal(k_beps, b_mu0.shape, jnp.float32)
    current_weight = w_mu_q + jax.nn.softplus(w_rho_q) * w_eps
    current_bias = b_mu_q + jax.nn.softplus(b_rho_q) * b_eps

    x = jax.random.normal(k_x, (N, Cin, H, W), jnp.float32)

    # forward() — hot path runs in the Pallas kernel.
    out = conv_transpose2d_pallas(x, current_weight, current_bias,
                                  stride, padding, output_padding, dilation)
    out = jax.block_until_ready(out)

    # forward() training side-effect: kl_div = KL(weight||weight_prior)+KL(bias||bias_prior)
    kl_div = (gaussian_kl(w_mu_q, w_rho_q, w_mu0, w_rho_p)
              + gaussian_kl(b_mu_q, b_rho_q, b_mu0, b_rho_p))
    kl_div = jax.block_until_ready(kl_div)
    assert bool(jnp.isfinite(kl_div)) and float(kl_div) >= 0.0

    # Sanity check against XLA's native transposed conv (same math as PyTorch).
    sH, sW = stride
    dH, dW = dilation
    pad_t = dH * (KH - 1) - padding[0]
    pad_l = dW * (KW - 1) - padding[1]
    w_oihw = jnp.transpose(jnp.flip(current_weight, axis=(2, 3)), (1, 0, 2, 3))
    ref = jax.lax.conv_general_dilated(
        x, w_oihw, window_strides=(1, 1),
        padding=((pad_t, pad_t + output_padding[0]), (pad_l, pad_l + output_padding[1])),
        lhs_dilation=(sH, sW), rhs_dilation=(dH, dW),
        dimension_numbers=("NCHW", "OIHW", "NCHW"),
        precision=jax.lax.Precision.HIGHEST,
    ) + current_bias[None, :, None, None]
    assert out.shape == (N, Cout, 32, 32)
    # Tolerance revalidated for bf16 operands + f32 accumulation (K <= 36 terms,
    # |w| <= 1/6, |x| ~ N(0,1)): worst-case abs error well below 3e-2, while any
    # indexing/layout bug would produce O(0.3) mismatches.
    err = float(jnp.max(jnp.abs(out - ref)))
    assert err < 3e-2, err

    print("KERNEL_OK")
</pallas_src>

<mosaic_0001>
module attributes {stable_mosaic.version = 11 : i64} {
  func.func @_deconv_mxu_kernel(%arg0: i32, %arg1: i32, %arg2: memref<8x48xbf16, #tpu.memory_space<vmem>>, %arg3: memref<8x1xf32, #tpu.memory_space<vmem>>, %arg4: memref<1x48x1024xbf16, #tpu.memory_space<vmem>>, %arg5: memref<1x8x1024xf32, #tpu.memory_space<vmem>>) attributes {dimension_semantics = [#tpu.dimension_semantics<parallel>, #tpu.dimension_semantics<parallel>], iteration_bounds = array<i64: 2, 1>, scalar_prefetch = 0 : i64, scratch_operands = 0 : i64, tpu.core_type = #tpu.core_type<tc>, window_params = [{pipeline_mode = #tpu.pipeline_mode<synchronous>, transform_indices = @transform_0, window_bounds = array<i64: 8, 48>}, {pipeline_mode = #tpu.pipeline_mode<synchronous>, transform_indices = @transform_1, window_bounds = array<i64: 8, 1>}, {transform_indices = @transform_2, window_bounds = array<i64: 1, 48, 1024>}, {transform_indices = @transform_3, window_bounds = array<i64: 1, 8, 1024>}]} {
    %c0 = arith.constant 0 : index
    %c0_0 = arith.constant 0 : index
    %0 = vector.load %arg2[%c0, %c0_0] : memref<8x48xbf16, #tpu.memory_space<vmem>>, vector<8x48xbf16>
    %c0_1 = arith.constant 0 : index
    %c0_2 = arith.constant 0 : index
    %c0_3 = arith.constant 0 : index
    %1 = vector.load %arg4[%c0_1, %c0_2, %c0_3] : memref<1x48x1024xbf16, #tpu.memory_space<vmem>>, vector<1x48x1024xbf16>
    %2 = vector.shape_cast %1 : vector<1x48x1024xbf16> to vector<48x1024xbf16>
    %cst = arith.constant dense<0.000000e+00> : vector<8x1024xf32>
    %3 = tpu.matmul %0, %2, %cst {dimension_numbers = #tpu.dot_dimension_numbers<[1], [0], [0], [1], [0, 0, 1, 1], [], []>} : vector<8x48xbf16>, vector<48x1024xbf16>, vector<8x1024xf32> -> vector<8x1024xf32>
    %c0_4 = arith.constant 0 : index
    %c0_5 = arith.constant 0 : index
    %4 = vector.load %arg3[%c0_4, %c0_5] : memref<8x1xf32, #tpu.memory_space<vmem>>, vector<8x1xf32>
    %5 = vector.broadcast %4 : vector<8x1xf32> to vector<8x1024xf32>
    %6 = arith.addf %3, %5 : vector<8x1024xf32>
    %c0_6 = arith.constant 0 : index
    %c0_7 = arith.constant 0 : index
    %c0_8 = arith.constant 0 : index
    %7 = vector.load %arg5[%c0_6, %c0_7, %c0_8] : memref<1x8x1024xf32, #tpu.memory_space<vmem>>, vector<1x8x1024xf32>
    %8 = vector.shape_cast %7 : vector<1x8x1024xf32> to vector<8x1024xf32>
    %9 = vector.shape_cast %6 : vector<8x1024xf32> to vector<1x8x1024xf32>
    tpu.vector_store %arg5[%c0_6, %c0_7, %c0_8], %9 {strides = array<i32>} : memref<1x8x1024xf32, #tpu.memory_space<vmem>>, vector<1x8x1024xf32>,
    return
  }
  func.func @transform_0(%arg0: i32, %arg1: i32) -> (i32, i32) {
    %c0_i32 = arith.constant 0 : i32
    %c0_i32_0 = arith.constant 0 : i32
    %c0_i32_1 = arith.constant 0 : i32
    return %c0_i32, %c0_i32_0 : i32, i32
  }
  func.func @transform_1(%arg0: i32, %arg1: i32) -> (i32, i32) {
    %c0_i32 = arith.constant 0 : i32
    %c0_i32_0 = arith.constant 0 : i32
    %c0_i32_1 = arith.constant 0 : i32
    return %c0_i32, %c0_i32_0 : i32, i32
  }
  func.func @transform_2(%arg0: i32, %arg1: i32) -> (i32, i32, i32) {
    %c0_i32 = arith.constant 0 : i32
    %c0_i32_0 = arith.constant 0 : i32
    return %arg0, %c0_i32, %arg1 : i32, i32, i32
  }
  func.func @transform_3(%arg0: i32, %arg1: i32) -> (i32, i32, i32) {
    %c0_i32 = arith.constant 0 : i32
    %c0_i32_0 = arith.constant 0 : i32
    return %arg0, %c0_i32, %arg1 : i32, i32, i32
  }
}

</mosaic_0001>

<llo_original>
// kernel: tpu_custom_call.1
$region0: #{tpu_custom_call.1}
  #allocation0 [shape = 'u32[]', space=smem, size = 0x4, offset = 0x4, fixed_abs, tag = 'smem constant byte address 0x4 - core index']
  #allocation1 [shape = 'u32[72,128]{1,0:T(1,128)}', space=vmem, size = 0x9000, scoped, tag = 'internal scratch']
  %s0 = inlined_call_operand.vmem [shape: bf16[8,48], index: 0, kind: input, shape index: {}]
  %s1 = inlined_call_operand.vmem [shape: f32[8,1], index: 1, kind: input, shape index: {}]
  %s2 = inlined_call_operand.hbm [shape: bf16[2,48,1024], index: 2, kind: input, shape index: {}]
  %s3 = inlined_call_operand.hbm [shape: f32[2,8,1024], index: 3, kind: output, shape index: {}]
  %s4 = sld [smem:[#allocation0]]
  $region49: #{tpu_custom_call.1} parent=0
    _
  %s6 = ssub.s32 1, %s4
  %s7 = scalar_select 0, %s6, %s4
  $region1: #{tpu_custom_call.1} parent=0
    #allocation2 [shape = 'u8[196608]{0}', space=vmem, size = 0x30000, scoped, tag = 'input window, operand 2']
    #allocation3 [shape = 's32[2]{0}', space=sflag, size = 0x8, scoped, tag = 'scoped memory for tpu_custom_call.1']
    #allocation4 [shape = 's32[2]{0}', space=sflag, size = 0x8, scoped, tag = 'scoped memory for tpu_custom_call.1']
    #allocation5 [shape = 'u8[65536]{0}', space=vmem, size = 0x10000, scoped, tag = 'output window, operand 0']
    %8 = vsyncpa [#allocation3], 0
    %s9 = scalar_lea.sflag [#allocation3], 1
    %10 = vsyncpa %s9, 0
    %11 = vsyncpa [#allocation4], 0
    %s12 = scalar_lea.sflag [#allocation4], 1
    %13 = vsyncpa %s12, 0
    loop: start=0, step=1, limit=4
    $region2: #{tpu_custom_call.1} parent=1 // loop_pre_header
      _
    $region3: #{tpu_custom_call.1} parent=1 // loop_header
      %s15 = sphi 0, %s19
      %p16 = scmp.ge.s32.totalorder %s15, 4
      %s22 = sphi 0, %s34
      %s23 = sphi 0, %s30
      %s24 = sphi 0, %s22
      %s25 = sphi 0, %s23
      %s26 = sphi 0, %s24
      %s27 = sphi 0, %s25
      %s35 = sphi 0, %s35
      %s37 = sphi 0, %s35
      %s38 = sphi 0, %s37
      %s52 = sphi 0, %s38
      %s56 = sphi 0, %s56
      %s58 = sphi 0, %s56
      %s59 = sphi 0, %s58
      %s73 = sphi 0, %s59
      %s81 = sphi 0, %s83
      %s84 = sphi 0, %s81
      %s85 = sphi 0, %s84
      %s101 = sphi 0, %s85
      %s109 = sphi 0, %s111
      %s112 = sphi 0, %s109
      %s113 = sphi 0, %s112
      %s129 = sphi 0, %s113
    $region4: #{tpu_custom_call.1} parent=1 // loop_header_branch
      %18 = sbr.rel (%p16) target = $region8
    $region5: #{tpu_custom_call.1} parent=1 // loop_body
      %s20 = ssub.s32 %s15, 1
      %s21 = ssub.s32 %s15, 2
      %s28 = sadd.s32 1, %s23
      %p29 = scmp.ge.s32.totalorder %s28, 1
      %s30 = scalar_select %p29, 0, %s28
      %s31 = sadd.s32 1, %s22
      %s32 = scalar_select %p29, %s31, %s22
      %p33 = scmp.ge.s32.totalorder %s32, 2
      %s34 = scalar_select %p33, 0, %s32
      %s36 = sadd.s32 %s35, 1
      %p39 = scmp.eq.s32.totalorder %s15, 1
      %p40 = scmp.ne.s32.totalorder %s35, %s37
      %p41 = scmp.eq.s32.totalorder %s15, 0
      %p42 = por %p40, %p41
      %p43 = scmp.ne.s32.totalorder %s35, %s37
      %p44 = scmp.eq.s32.totalorder %s20, 1
      %p45 = por %p43, %p44
      %p46 = scmp.ne.s32.totalorder %s37, %s38
      %p47 = scmp.eq.s32.totalorder %s20, 0
      %p48 = por %p46, %p47
      %p49 = scmp.ne.s32.totalorder %s37, %s38
      %p50 = scmp.eq.s32.totalorder %s21, 1
      %p51 = por %p49, %p50
      %p53 = scmp.ne.s32.totalorder %s38, %s52
      %p54 = scmp.eq.s32.totalorder %s21, 0
      %p55 = por %p53, %p54
      %s57 = sadd.s32 %s56, 1
      %p60 = scmp.eq.s32.totalorder %s15, 1
      %p61 = scmp.ne.s32.totalorder %s56, %s58
      %p62 = scmp.eq.s32.totalorder %s15, 0
      %p63 = por %p61, %p62
      %p64 = scmp.ne.s32.totalorder %s56, %s58
      %p65 = scmp.eq.s32.totalorder %s20, 1
      %p66 = por %p64, %p65
      %p67 = scmp.ne.s32.totalorder %s58, %s59
      %p68 = scmp.eq.s32.totalorder %s20, 0
      %p69 = por %p67, %p68
      %p70 = scmp.ne.s32.totalorder %s58, %s59
      %p71 = scmp.eq.s32.totalorder %s21, 1
      %p72 = por %p70, %p71
      %p74 = scmp.ne.s32.totalorder %s59, %s73
      %p75 = scmp.eq.s32.totalorder %s21, 0
      %p76 = por %p74, %p75
      %s77 = ssub.s32 %s22, %s34
      %s78 = ssub.s32 %s23, %s30
      %s79 = sor.u32 %s77, %s78
      %p80 = scmp.eq.s32.totalorder %s79, 0
      %s82 = sadd.s32 %s81, 1
      %s83 = scalar_select %p80, %s81, %s82
      %p86 = pneg %p80
      %p87 = scmp.eq.s32.totalorder %s15, 1
      %p88 = por %p86, %p87
      %p89 = scmp.ne.s32.totalorder %s81, %s84
      %p90 = scmp.eq.s32.totalorder %s15, 0
      %p91 = por %p89, %p90
      %p92 = scmp.ne.s32.totalorder %s81, %s84
      %p93 = scmp.eq.s32.totalorder %s20, 1
      %p94 = por %p92, %p93
      %p95 = scmp.ne.s32.totalorder %s84, %s85
      %p96 = scmp.eq.s32.totalorder %s20, 0
      %p97 = por %p95, %p96
      %p98 = scmp.ne.s32.totalorder %s84, %s85
      %p99 = scmp.eq.s32.totalorder %s21, 1
      %p100 = por %p98, %p99
      %p102 = scmp.ne.s32.totalorder %s85, %s101
      %p103 = scmp.eq.s32.totalorder %s21, 0
      %p104 = por %p102, %p103
      %s105 = ssub.s32 %s22, %s34
      %s106 = ssub.s32 %s23, %s30
      %s107 = sor.u32 %s105, %s106
      %p108 = scmp.eq.s32.totalorder %s107, 0
      %s110 = sadd.s32 %s109, 1
      %s111 = scalar_select %p108, %s109, %s110
      %p114 = pneg %p108
      %p115 = scmp.eq.s32.totalorder %s15, 1
      %p116 = por %p114, %p115
      %p117 = scmp.ne.s32.totalorder %s109, %s112
      %p118 = scmp.eq.s32.totalorder %s15, 0
      %p119 = por %p117, %p118
      %p120 = scmp.ne.s32.totalorder %s109, %s112
      %p121 = scmp.eq.s32.totalorder %s20, 1
      %p122 = por %p120, %p121
      %p123 = scmp.ne.s32.totalorder %s112, %s113
      %p124 = scmp.eq.s32.totalorder %s20, 0
      %p125 = por %p123, %p124
      %p126 = scmp.ne.s32.totalorder %s112, %s113
      %p127 = scmp.eq.s32.totalorder %s21, 1
      %p128 = por %p126, %p127
      %p130 = scmp.ne.s32.totalorder %s113, %s129
      %p131 = scmp.eq.s32.totalorder %s21, 0
      %p132 = por %p130, %p131
      %p133 = scmp.le.s32.totalorder 1, %s15
      %p134 = scmp.lt.s32.totalorder %s15, 3
      %p135 = pnand %p133, %p134
      %p136 = pneg %p135
      // Predicated region
      $region9: #{tpu_custom_call.1} parent=5 // pred_check
        _
      $region10: #{tpu_custom_call.1} parent=5 // pred_check_branch
        %138 = sbr.rel (%p135) target = $region12
      $region11: #{tpu_custom_call.1} parent=5 // pred_region
        %s139 = ssub.s32 %s15, 1
        // Predicated region
        $region13: #{tpu_custom_call.1} parent=11 // pred_check
          %p140 = pneg %p48
        $region14: #{tpu_custom_call.1} parent=11 // pred_check_branch
          %142 = sbr.rel (%p140) target = $region16
        $region15: #{tpu_custom_call.1} parent=11 // pred_region
          _
        $region16: #{tpu_custom_call.1} parent=11 // pred_fallthru
          _
        // Predicated region
        $region17: #{tpu_custom_call.1} parent=11 // pred_check
          %p143 = pneg %p69
        $region18: #{tpu_custom_call.1} parent=11 // pred_check_branch
          %145 = sbr.rel (%p143) target = $region20
        $region19: #{tpu_custom_call.1} parent=11 // pred_region
          _
        $region20: #{tpu_custom_call.1} parent=11 // pred_fallthru
          _
      $region12: #{tpu_custom_call.1} parent=5 // pred_fallthru
        _
      %p146 = scmp.lt.s32.totalorder %s15, 2
      // Predicated region
      $region21: #{tpu_custom_call.1} parent=5 // pred_check
        %p147 = pneg %p146
      $region22: #{tpu_custom_call.1} parent=5 // pred_check_branch
        %149 = sbr.rel (%p147) target = $region24
      $region23: #{tpu_custom_call.1} parent=5 // pred_region
        // Predicated region
        $region25: #{tpu_custom_call.1} parent=23 // pred_check
          %p150 = pneg %p91
        $region26: #{tpu_custom_call.1} parent=23 // pred_check_branch
          %152 = sbr.rel (%p150) target = $region28
        $region27: #{tpu_custom_call.1} parent=23 // pred_region
          %s153 = sand.u32 %s81, 1
          %s154 = scalar_lea.sflag [#allocation3], %s153
          %s155 = sand.u32 %s81, 1
          %s156 = smul.addr %s155, 192
          %s157 = scalar_lea.vmem [#allocation2], %s156
          %s158 = smul.u32 8, %s23
          %160 = vsyncadd %s154, 0
          %s161 = smul.addr %s22, 48
          %s162 = sadd.s32 %s158, %s161
          %s163 = smul.addr %s162, 4
          %s164 = scalar_lea.hbm %s2, %s163
          %s165 = sshll.u32 %s164, 4
          %s166 = int_to_ptr.hbm [resolvable:$true] %s165
          %s167 = sshll.u32 %s157, 4
          %s168 = int_to_ptr.vmem [resolvable:$true] %s167
          %173 = dma.hbm_to_vmem [thread:$0]  %s166, 3072, %s168, %s154, 512, 512, 32
        $region28: #{tpu_custom_call.1} parent=23 // pred_fallthru
          _
      $region24: #{tpu_custom_call.1} parent=5 // pred_fallthru
        _
      %p174 = scmp.le.s32.totalorder 1, %s15
      %p175 = scmp.lt.s32.totalorder %s15, 3
      %p176 = pnand %p174, %p175
      %p177 = pneg %p176
      // Predicated region
      $region29: #{tpu_custom_call.1} parent=5 // pred_check
        _
      $region30: #{tpu_custom_call.1} parent=5 // pred_check_branch
        %179 = sbr.rel (%p176) target = $region32
      $region31: #{tpu_custom_call.1} parent=5 // pred_region
        %s180 = ssub.s32 %s15, 1
        %s181 = sand.u32 %s84, 1
        %s182 = scalar_lea.sflag [#allocation3], %s181
        %s183 = sand.u32 %s84, 1
        %s184 = smul.addr %s183, 192
        %s185 = scalar_lea.vmem [#allocation2], %s184
        // Predicated region
        $region33: #{tpu_custom_call.1} parent=31 // pred_check
          %p186 = pneg %p97
        $region34: #{tpu_custom_call.1} parent=31 // pred_check_branch
          %188 = sbr.rel (%p186) target = $region36
        $region35: #{tpu_custom_call.1} parent=31 // pred_region
          %190 = dma.done %s182, 3072
        $region36: #{tpu_custom_call.1} parent=31 // pred_fallthru
          _
        %p191 = pneg %p48
        %p192 = pneg %p45
        %p193 = pneg %p69
        %p194 = pneg %p66
        %s195 = sand.u32 %s84, 1
        %s196 = scalar_lea.sflag [#allocation3], %s195
        %s197 = sand.u32 %s84, 1
        %s198 = smul.addr %s197, 192
        %s199 = scalar_lea.vmem [#allocation2], %s198
        %p200 = pneg %p97
        %p201 = pneg %p94
        %p202 = pneg %p125
        %p203 = pneg %p122
        %s204 = sand.u32 %s112, 1
        %s205 = scalar_lea.sflag [#allocation4], %s204
        %s206 = sand.u32 %s112, 1
        %s207 = smul.addr %s206, 64
        %s208 = scalar_lea.vmem [#allocation5], %s207
        %s209 = smul.u32 8, %s25
        %s210 = smul.u32 8, %s25
        %v212 = vld [vmem:[%s0] sm:$0xf]
        %v213 = vld [vmem:[%s185] sm:$0xff]
        %v214 = vld [vmem:[%s185 + $0x8] sm:$0xff]
        %v215 = vld [vmem:[%s185 + $0x10] sm:$0xff]
        %v216 = vld [vmem:[%s185 + $0x18] sm:$0xff]
        %v217 = vld [vmem:[%s185 + $0x20] sm:$0xff]
        %v218 = vld [vmem:[%s185 + $0x28] sm:$0xff]
        %v219 = vld [vmem:[%s185 + $0x30] sm:$0xff]
        %v220 = vld [vmem:[%s185 + $0x38] sm:$0xff]
        %v221 = vld [vmem:[%s185 + $0x40] sm:$0xff]
        %v222 = vld [vmem:[%s185 + $0x48] sm:$0xff]
        %v223 = vld [vmem:[%s185 + $0x50] sm:$0xff]
        %v224 = vld [vmem:[%s185 + $0x58] sm:$0xff]
        %v225 = vld [vmem:[%s185 + $0x60] sm:$0xff]
        %v226 = vld [vmem:[%s185 + $0x68] sm:$0xff]
        %v227 = vld [vmem:[%s185 + $0x70] sm:$0xff]
        %v228 = vld [vmem:[%s185 + $0x78] sm:$0xff]
        %v229 = vld [vmem:[%s185 + $0x80] sm:$0xff]
        %v230 = vld [vmem:[%s185 + $0x88] sm:$0xff]
        %v231 = vld [vmem:[%s185 + $0x90] sm:$0xff]
        %v232 = vld [vmem:[%s185 + $0x98] sm:$0xff]
        %v233 = vld [vmem:[%s185 + $0xa0] sm:$0xff]
        %v234 = vld [vmem:[%s185 + $0xa8] sm:$0xff]
        %v235 = vld [vmem:[%s185 + $0xb0] sm:$0xff]
        %v236 = vld [vmem:[%s185 + $0xb8] sm:$0xff]
        %v237 = vld [vmem:[%s1] sm:$0xff]
        %239 = vset.pattern.permute.xlu0 0
        %240 = vperm.xlu0 %239, %v237
        %v241 = vpop.permute.xlu0 %240
        %v267 = vunpack.c.l.b16 %v213
        %v268 = vunpack.c.h.b16 %v213
        %v269 = vunpack.c.l.b16 %v214
        %v270 = vunpack.c.h.b16 %v214
        %v271 = vunpack.c.l.b16 %v215
        %v272 = vunpack.c.h.b16 %v215
        %v273 = vunpack.c.l.b16 %v216
        %v274 = vunpack.c.h.b16 %v216
        %v275 = vunpack.c.l.b16 %v217
        %v276 = vunpack.c.h.b16 %v217
        %v277 = vunpack.c.l.b16 %v218
        %v278 = vunpack.c.h.b16 %v218
        %v279 = vunpack.c.l.b16 %v219
        %v280 = vunpack.c.h.b16 %v219
        %v281 = vunpack.c.l.b16 %v220
        %v282 = vunpack.c.h.b16 %v220
        %v283 = vunpack.c.l.b16 %v221
        %v284 = vunpack.c.h.b16 %v221
        %v285 = vunpack.c.l.b16 %v222
        %v286 = vunpack.c.h.b16 %v222
        %v287 = vunpack.c.l.b16 %v223
        %v288 = vunpack.c.h.b16 %v223
        %v289 = vunpack.c.l.b16 %v224
        %v290 = vunpack.c.h.b16 %v224
        %v291 = vunpack.c.l.b16 %v225
        %v292 = vunpack.c.h.b16 %v225
        %v293 = vunpack.c.l.b16 %v226
        %v294 = vunpack.c.h.b16 %v226
        %v295 = vunpack.c.l.b16 %v227
        %v296 = vunpack.c.h.b16 %v227
        %v297 = vunpack.c.l.b16 %v228
        %v298 = vunpack.c.h.b16 %v228
        %v299 = vunpack.c.l.b16 %v229
        %v300 = vunpack.c.h.b16 %v229
        %v301 = vunpack.c.l.b16 %v230
        %v302 = vunpack.c.h.b16 %v230
        %v303 = vunpack.c.l.b16 %v231
        %v304 = vunpack.c.h.b16 %v231
        %v305 = vunpack.c.l.b16 %v232
        %v306 = vunpack.c.h.b16 %v232
        %v307 = vunpack.c.l.b16 %v233
        %v308 = vunpack.c.h.b16 %v233
        %v309 = vunpack.c.l.b16 %v234
        %v310 = vunpack.c.h.b16 %v234
        %v311 = vunpack.c.l.b16 %v235
        %v312 = vunpack.c.h.b16 %v235
        %v313 = vunpack.c.l.b16 %v236
        %v314 = vunpack.c.h.b16 %v236
        %v315 = vpack.c.b16 %v275, %v267
        %v316 = vpack.c.b16 %v276, %v268
        %v317 = vpack.c.b16 %v277, %v269
        %v318 = vpack.c.b16 %v278, %v270
        %v319 = vpack.c.b16 %v279, %v271
        %v320 = vpack.c.b16 %v280, %v272
        %v321 = vpack.c.b16 %v281, %v273
        %v322 = vpack.c.b16 %v282, %v274
        %v323 = vpack.c.b16 %v291, %v283
        %v324 = vpack.c.b16 %v292, %v284
        %v325 = vpack.c.b16 %v293, %v285
        %v326 = vpack.c.b16 %v294, %v286
        %v327 = vpack.c.b16 %v295, %v287
        %v328 = vpack.c.b16 %v296, %v288
        %v329 = vpack.c.b16 %v297, %v289
        %v330 = vpack.c.b16 %v298, %v290
        %v331 = vpack.c.b16 %v307, %v299
        %v332 = vpack.c.b16 %v308, %v300
        %v333 = vpack.c.b16 %v309, %v301
        %v334 = vpack.c.b16 %v310, %v302
        %v335 = vpack.c.b16 %v311, %v303
        %v336 = vpack.c.b16 %v312, %v304
        %v337 = vpack.c.b16 %v313, %v305
        %v338 = vpack.c.b16 %v314, %v306
        %vm363 = vcmask 392192
        %v365 = vsel %vm363, %v212, 0
        %367 = vmatpush.bf16.msra.mxu0 0
        %368 = vmatpush.bf16.msra.mxu0 0
        %369 = vmatpush.bf16.msra.mxu0 0
        %370 = vmatpush.bf16.msra.mxu0 0
        %371 = vmatpush.bf16.msra.mxu0 0
        %372 = vmatpush.bf16.msra.mxu0 %v331
        %373 = vmatpush.bf16.msra.mxu0 %v323
        %374 = vmatpush.bf16.msra.mxu0 %v315
        %375 = vmatmul.bf16.gmra.mxu0 %v365
        %v376 = vpop.f32.mrf.mxu0
        %v377 = vadd.f32 %v241, %v376
        %v378 = vpop.f32.mrf.mxu0
        %379 = vdwg.mxu0
        %380 = vmatpush.bf16.msra.mxu0 0
        %381 = vmatpush.bf16.msra.mxu0 0
        %382 = vmatpush.bf16.msra.mxu0 0
        %383 = vmatpush.bf16.msra.mxu0 0
        %384 = vmatpush.bf16.msra.mxu0 0
        %385 = vmatpush.bf16.msra.mxu0 %v332
        %386 = vmatpush.bf16.msra.mxu0 %v324
        %387 = vmatpush.bf16.msra.mxu0 %v316
        %388 = vmatmul.bf16.gmra.mxu0 %v365
        %v389 = vpop.f32.mrf.mxu0
        %v390 = vadd.f32 %v241, %v389
        %v391 = vpop.f32.mrf.mxu0
        %392 = vdwg.mxu0
        %393 = vmatpush.bf16.msra.mxu0 0
        %394 = vmatpush.bf16.msra.mxu0 0
        %395 = vmatpush.bf16.msra.mxu0 0
        %396 = vmatpush.bf16.msra.mxu0 0
        %397 = vmatpush.bf16.msra.mxu0 0
        %398 = vmatpush.bf16.msra.mxu0 %v333
        %399 = vmatpush.bf16.msra.mxu0 %v325
        %400 = vmatpush.bf16.msra.mxu0 %v317
        %401 = vmatmul.bf16.gmra.mxu0 %v365
        %v402 = vpop.f32.mrf.mxu0
        %v403 = vadd.f32 %v241, %v402
        %v404 = vpop.f32.mrf.mxu0
        %405 = vdwg.mxu0
        %406 = vmatpush.bf16.msra.mxu0 0
        %407 = vmatpush.bf16.msra.mxu0 0
        %408 = vmatpush.bf16.msra.mxu0 0
        %409 = vmatpush.bf16.msra.mxu0 0
        %410 = vmatpush.bf16.msra.mxu0 0
        %411 = vmatpush.bf16.msra.mxu0 %v334
        %412 = vmatpush.bf16.msra.mxu0 %v326
        %413 = vmatpush.bf16.msra.mxu0 %v318
        %414 = vmatmul.bf16.gmra.mxu0 %v365
        %v415 = vpop.f32.mrf.mxu0
        %v416 = vadd.f32 %v241, %v415
        %v417 = vpop.f32.mrf.mxu0
        %418 = vdwg.mxu0
        %419 = vmatpush.bf16.msra.mxu0 0
        %420 = vmatpush.bf16.msra.mxu0 0
        %421 = vmatpush.bf16.msra.mxu0 0
        %422 = vmatpush.bf16.msra.mxu0 0
        %423 = vmatpush.bf16.msra.mxu0 0
        %424 = vmatpush.bf16.msra.mxu0 %v335
        %425 = vmatpush.bf16.msra.mxu0 %v327
        %426 = vmatpush.bf16.msra.mxu0 %v319
        %427 = vmatmul.bf16.gmra.mxu0 %v365
        %v428 = vpop.f32.mrf.mxu0
        %v429 = vadd.f32 %v241, %v428
        %v430 = vpop.f32.mrf.mxu0
        %431 = vdwg.mxu0
        %432 = vmatpush.bf16.msra.mxu0 0
        %433 = vmatpush.bf16.msra.mxu0 0
        %434 = vmatpush.bf16.msra.mxu0 0
        %435 = vmatpush.bf16.msra.mxu0 0
        %436 = vmatpush.bf16.msra.mxu0 0
        %437 = vmatpush.bf16.msra.mxu0 %v336
        %438 = vmatpush.bf16.msra.mxu0 %v328
        %439 = vmatpush.bf16.msra.mxu0 %v320
        %440 = vmatmul.bf16.gmra.mxu0 %v365
        %v441 = vpop.f32.mrf.mxu0
        %v442 = vadd.f32 %v241, %v441
        %v443 = vpop.f32.mrf.mxu0
        %444 = vdwg.mxu0
        %445 = vmatpush.bf16.msra.mxu0 0
        %446 = vmatpush.bf16.msra.mxu0 0
        %447 = vmatpush.bf16.msra.mxu0 0
        %448 = vmatpush.bf16.msra.mxu0 0
        %449 = vmatpush.bf16.msra.mxu0 0
        %450 = vmatpush.bf16.msra.mxu0 %v337
        %451 = vmatpush.bf16.msra.mxu0 %v329
        %452 = vmatpush.bf16.msra.mxu0 %v321
        %453 = vmatmul.bf16.gmra.mxu0 %v365
        %v454 = vpop.f32.mrf.mxu0
        %v455 = vadd.f32 %v241, %v454
        %v456 = vpop.f32.mrf.mxu0
        %457 = vdwg.mxu0
        %458 = vmatpush.bf16.msra.mxu0 0
        %459 = vmatpush.bf16.msra.mxu0 0
        %460 = vmatpush.bf16.msra.mxu0 0
        %461 = vmatpush.bf16.msra.mxu0 0
        %462 = vmatpush.bf16.msra.mxu0 0
        %463 = vmatpush.bf16.msra.mxu0 %v338
        %464 = vmatpush.bf16.msra.mxu0 %v330
        %465 = vmatpush.bf16.msra.mxu0 %v322
        %466 = vmatmul.bf16.gmra.mxu0 %v365
        %v467 = vpop.f32.mrf.mxu0
        %v468 = vadd.f32 %v241, %v467
        %v469 = vpop.f32.mrf.mxu0
        %470 = vdwg.mxu0
        %471 = vst [vmem:[%s208] sm:$0xff] %v377
        %472 = vst [vmem:[%s208 + $0x8] sm:$0xff] %v390
        %473 = vst [vmem:[%s208 + $0x10] sm:$0xff] %v403
        %474 = vst [vmem:[%s208 + $0x18] sm:$0xff] %v416
        %475 = vst [vmem:[%s208 + $0x20] sm:$0xff] %v429
        %476 = vst [vmem:[%s208 + $0x28] sm:$0xff] %v442
        %477 = vst [vmem:[%s208 + $0x30] sm:$0xff] %v455
        %478 = vst [vmem:[%s208 + $0x38] sm:$0xff] %v468
        %s479 = sand.u32 %s112, 1
        %s480 = scalar_lea.sflag [#allocation4], %s479
        %s481 = sand.u32 %s112, 1
        %s482 = smul.addr %s481, 64
        %s483 = scalar_lea.vmem [#allocation5], %s482
        // Predicated region
        $region37: #{tpu_custom_call.1} parent=31 // pred_check
          %p484 = pneg %p122
        $region38: #{tpu_custom_call.1} parent=31 // pred_check_branch
          %486 = sbr.rel (%p484) target = $region40
        $region39: #{tpu_custom_call.1} parent=31 // pred_region
          %s487 = smul.u32 8, %s25
          %489 = vsyncadd %s480, 0
          %s490 = smul.addr %s24, 8
          %s491 = sadd.s32 %s487, %s490
          %s492 = smul.addr %s491, 8
          %s493 = scalar_lea.hbm %s3, %s492
          %s495 = sshll.u32 %s483, 4
          %s496 = int_to_ptr.vmem [resolvable:$true] %s495
          %s497 = sshll.u32 %s493, 4
          %s498 = int_to_ptr.hbm [resolvable:$true] %s497
          %500 = dma.vmem_to_hbm [thread:$0]  %s496, 1024, %s498, %s480
        $region40: #{tpu_custom_call.1} parent=31 // pred_fallthru
          _
      $region32: #{tpu_custom_call.1} parent=5 // pred_fallthru
        _
      %p501 = scmp.le.s32.totalorder 2, %s15
      // Predicated region
      $region41: #{tpu_custom_call.1} parent=5 // pred_check
        %p502 = pneg %p501
      $region42: #{tpu_custom_call.1} parent=5 // pred_check_branch
        %504 = sbr.rel (%p502) target = $region44
      $region43: #{tpu_custom_call.1} parent=5 // pred_region
        %s505 = ssub.s32 %s15, 2
        // Predicated region
        $region45: #{tpu_custom_call.1} parent=43 // pred_check
          %p506 = pneg %p128
        $region46: #{tpu_custom_call.1} parent=43 // pred_check_branch
          %508 = sbr.rel (%p506) target = $region48
        $region47: #{tpu_custom_call.1} parent=43 // pred_region
          %s509 = sand.u32 %s113, 1
          %s510 = scalar_lea.sflag [#allocation4], %s509
          %s511 = sand.u32 %s113, 1
          %s512 = smul.addr %s511, 64
          %s513 = scalar_lea.vmem [#allocation5], %s512
          %515 = dma.done %s510, 1024
        $region48: #{tpu_custom_call.1} parent=43 // pred_fallthru
          _
      $region44: #{tpu_custom_call.1} parent=5 // pred_fallthru
        _
    $region6: #{tpu_custom_call.1} parent=1 // loop_footer
      %s19 = sadd.s32 1, %s15
    $region7: #{tpu_custom_call.1} parent=1 // loop_footer_branch
      %14 = sbr.rel target = $region3
    $region8: #{tpu_custom_call.1} parent=1 // loop_exit
      _
    %516 = vsyncpa [#allocation3], 1
    %s517 = scalar_lea.sflag [#allocation3], 1
    %518 = vsyncpa %s517, 1
    %519 = vsyncpa [#allocation4], 1
    %s520 = scalar_lea.sflag [#allocation4], 1
    %521 = vsyncpa %s520, 1

</llo_original>
